<compile_context>
chip_gen: v7x
topology: tpu7x:2x2x1
jax: 0.10.0
libtpu: 0.0.40
codegen_flags: <defaults>
</compile_context>

<pallas_src>
import functools

import jax
import jax.numpy as jnp
from jax.experimental import pallas as pl
from jax.experimental.pallas import tpu as pltpu


LN_EPS = 1e-5  # matches torch.nn.LayerNorm default


# ----------------------------- Pallas kernels ------------------------------ #

def encode_ln_kernel(x_ref, w_ref, b_ref, g_ref, beta_ref, o_ref):
    # x: (TM, K) bf16, w: (K, D) bf16, b/g/beta: (1, D) f32, o: (TM, D) f32
    y = jnp.dot(x_ref[...], w_ref[...],
                preferred_element_type=jnp.float32) + b_ref[...]
    mean = jnp.mean(y, axis=-1, keepdims=True)
    var = jnp.mean(jnp.square(y - mean), axis=-1, keepdims=True)
    o_ref[...] = (y - mean) * jax.lax.rsqrt(var + LN_EPS) * g_ref[...] + beta_ref[...]


def encode_decode_fuse_kernel(x_ref, w_ref, b_ref, g_ref, beta_ref,
                              wd_ref, bd_ref, cd_ref, o_ref):
    # Fused dpt path: patch-embed -> LayerNorm -> decoder linear -> GELU ->
    # adaptive fusion with per-token (confidence, dpt) scalars.
    # x: (TM, K) bf16, w: (K, D) bf16, wd: (D, Dd) bf16,
    # b/g/beta: (1, D) f32, bd: (1, Dd) f32, cd: (TM, 2) f32 [conf, dpt].
    y = jnp.dot(x_ref[...], w_ref[...],
                preferred_element_type=jnp.float32) + b_ref[...]
    mean = jnp.mean(y, axis=-1, keepdims=True)
    var = jnp.mean(jnp.square(y - mean), axis=-1, keepdims=True)
    # Cast LayerNorm output to bf16 right away: only one f32 (TM, D) temp
    # stays live across the second MXU call (keeps spill pressure down at
    # large token tiles).
    tok = ((y - mean) * jax.lax.rsqrt(var + LN_EPS) * g_ref[...]
           + beta_ref[...]).astype(jnp.bfloat16)
    z = jnp.dot(tok, wd_ref[...],
                preferred_element_type=jnp.float32) + bd_ref[...]
    c = cd_ref[:, 0:1]                     # confidence (TM, 1)
    d = cd_ref[:, 1:2]                     # resized dpt prediction (TM, 1)
    # TODO(synk): torch.nn.GELU default is exact erf; tanh approximation used
    # for the stand-in decoder block.
    o_ref[...] = jax.nn.gelu(z, approximate=True) * (1.0 - c) + d * c


# ------------------------------ JAX wrappers -------------------------------- #

def _choose_tm(M, tile_m=1024):
    """Token tile: as big as possible (amortize ~0.35us/step grid overhead)
    while keeping >= 2 grid steps when M allows it (v7x has 2 TensorCores and
    the 'parallel' axis is how they both get fed).  Multiple of 8 sublanes."""
    if M <= 8:
        return M                          # single full-extent block
    tm = min(tile_m, M)
    if tm >= M:                           # grid would collapse to 1 step
        tm = max(8, (M // 2 // 8) * 8)
    else:
        tm = max(8, (tm // 8) * 8)
    return tm


def patchify(images, patch):
    # NCHW -> (B * num_patches, C * patch * patch)   (ViT patch-embed im2col)
    # TODO(synk): the (C,P,P)->K rearrangement could be moved inside the Pallas
    # pipeline but relies on minor-dim transposes that do not lower robustly in
    # Mosaic; kept wrapper-side (it fuses under jit with the bf16 cast).
    B, C, H, W = images.shape
    hp, wp = H // patch, W // patch
    x = images.reshape(B, C, hp, patch, wp, patch)
    x = x.transpose(0, 2, 4, 1, 3, 5)
    return x.reshape(B * hp * wp, C * patch * patch)


def encode_tokens(patches, w, b, gamma, beta, *, tile_m=1024):
    """Patch-embed matmul + LayerNorm, tiled over tokens (non-dpt path)."""
    M, K = patches.shape
    D = w.shape[1]
    tm = _choose_tm(M, tile_m)
    x = patches.astype(jnp.bfloat16)
    wq = w.astype(jnp.bfloat16)
    return pl.pallas_call(
        encode_ln_kernel,
        out_shape=jax.ShapeDtypeStruct((M, D), jnp.float32),
        grid=(pl.cdiv(M, tm),),
        in_specs=[
            pl.BlockSpec((tm, K), lambda i: (i, 0)),   # full-K block (no pad)
            pl.BlockSpec((K, D), lambda i: (0, 0)),    # weights stay resident
            pl.BlockSpec((1, D), lambda i: (0, 0)),
            pl.BlockSpec((1, D), lambda i: (0, 0)),
            pl.BlockSpec((1, D), lambda i: (0, 0)),
        ],
        out_specs=pl.BlockSpec((tm, D), lambda i: (i, 0)),
        compiler_params=pltpu.CompilerParams(
            dimension_semantics=("parallel",),
            vmem_limit_bytes=32 * 1024 * 1024,
        ),
    )(x, wq, b.reshape(1, D), gamma.reshape(1, D), beta.reshape(1, D))


def encode_decode_fuse(patches, w, b, gamma, beta, w_dec, b_dec, cd,
                       *, tile_m=1024):
    """Fused dpt path: encode + decoder stand-in + adaptive DPT fusion.
    cd is the packed (M, 2) [confidence, dpt] per-token operand."""
    M, K = patches.shape
    D = w.shape[1]
    Dd = w_dec.shape[1]
    tm = _choose_tm(M, tile_m)
    x = patches.astype(jnp.bfloat16)
    wq = w.astype(jnp.bfloat16)
    wd = w_dec.astype(jnp.bfloat16)
    return pl.pallas_call(
        encode_decode_fuse_kernel,
        out_shape=jax.ShapeDtypeStruct((M, Dd), jnp.float32),
        grid=(pl.cdiv(M, tm),),
        in_specs=[
            pl.BlockSpec((tm, K), lambda i: (i, 0)),
            pl.BlockSpec((K, D), lambda i: (0, 0)),
            pl.BlockSpec((1, D), lambda i: (0, 0)),
            pl.BlockSpec((1, D), lambda i: (0, 0)),
            pl.BlockSpec((1, D), lambda i: (0, 0)),
            pl.BlockSpec((D, Dd), lambda i: (0, 0)),
            pl.BlockSpec((1, Dd), lambda i: (0, 0)),
            pl.BlockSpec((tm, 2), lambda i: (i, 0)),   # packed conf+dpt
        ],
        out_specs=pl.BlockSpec((tm, Dd), lambda i: (i, 0)),
        compiler_params=pltpu.CompilerParams(
            dimension_semantics=("parallel",),
            vmem_limit_bytes=32 * 1024 * 1024,
        ),
    )(x, wq, b.reshape(1, D), gamma.reshape(1, D), beta.reshape(1, D),
      wd, b_dec.reshape(1, Dd), cd)


def fold_normalization(w_patch, b_patch, mean, std, patch):
    """Exactly fold (x - mean)/std into the patch-embed linear layer.
    Patch rows are ordered (c, py, px) -> index c*P*P + py*P + px."""
    reps = patch * patch
    std_rows = jnp.repeat(std, reps)          # (K,)
    mean_rows = jnp.repeat(mean, reps)        # (K,)
    w_fold = w_patch / std_rows[:, None]
    b_fold = b_patch - (mean_rows / std_rows) @ w_patch
    return w_fold, b_fold


def bilinear_matrix(out_size, in_size):
    """Separable bilinear interpolation weights, matching
    F.interpolate(mode='bilinear', align_corners=False)."""
    i = jnp.arange(out_size, dtype=jnp.float32)
    src = (i + 0.5) * (float(in_size) / float(out_size)) - 0.5
    src = jnp.clip(src, 0.0, float(in_size - 1))
    lo = jnp.floor(src).astype(jnp.int32)
    hi = jnp.minimum(lo + 1, in_size - 1)
    frac = src - lo.astype(jnp.float32)
    rows = jnp.arange(out_size)
    w = jnp.zeros((out_size, in_size), jnp.float32)
    w = w.at[rows, lo].add(1.0 - frac)
    w = w.at[rows, hi].add(frac)
    return w


# ------------------------- jitted forward functions ------------------------- #

@functools.partial(jax.jit, static_argnames=("patch",))
def _forward_layer(images, w_fold, b_fold, gamma, beta, *, patch):
    B, _, H, W = images.shape
    hp, wp = H // patch, W // patch
    patches = patchify(images, patch)                         # (B*N, 3*P*P)
    tokens = encode_tokens(patches, w_fold, b_fold, gamma, beta)
    D = tokens.shape[1]
    # (B, N, D) -> (B, h_p, w_p, D) -> (B, D, h_p, w_p), exactly as in torch.
    feature_maps = tokens.reshape(B, hp, wp, D).transpose(0, 3, 1, 2)
    cls_tokens = jnp.zeros((B, D), jnp.float32)
    return {"cls_tokens": cls_tokens, "feature_maps": feature_maps}


@functools.partial(jax.jit, static_argnames=("patch",))
def _forward_dpt(images, dpt_pred, dpt_conf, w_patch, b_patch, gamma, beta,
                 w_dec, b_dec, *, patch):
    B, _, H, W = images.shape
    hp, wp = H // patch, W // patch
    N = hp * wp
    patches = patchify(images, patch)                         # images NOT normalized
    _, dpt_c, ph, pw = dpt_pred.shape
    assert dpt_c == 1
    # Resize dpt_pred / confidence to the decoder patch grid (tiny vs. features),
    # matching F.interpolate(mode='bilinear', align_corners=False).
    wh = bilinear_matrix(hp, ph)                              # (h_p, ph)
    ww = bilinear_matrix(wp, pw)                              # (w_p, pw)
    dpt_r = jnp.einsum('hp,bpq,wq->bhw', wh, dpt_pred[:, 0], ww)
    conf_r = jnp.einsum('hp,bpq,wq->bhw', wh, dpt_conf, ww)
    cd = jnp.stack([conf_r.reshape(B * N), dpt_r.reshape(B * N)], axis=-1)  # (M, 2)
    fused = encode_decode_fuse(patches, w_patch, b_patch, gamma, beta,
                               w_dec, b_dec, cd)              # (B*N, DEC_DIM)
    Dd = fused.shape[1]
    feature_maps = fused.reshape(B, hp, wp, Dd).transpose(0, 3, 1, 2)
    cls_tokens = jnp.zeros((B, Dd), jnp.float32)
    return {"cls_tokens": cls_tokens, "feature_maps": feature_maps}


# --------------------------- Feature extractor ------------------------------ #

class CrocoFeatureExtractorPallas:
    """JAX/Pallas version of CrocoFeatureExtractor.forward.

    is_dpt=False + layer_index   -> encoder-layer path (normalize + enc_norm),
                                    with the normalization folded into weights.
    is_dpt=True  + decoder index -> decoder path + adaptive fusion with DPT
                                    prediction, fully fused in one kernel.
    """

    PATCH = 8
    ENC_DIM = 128
    DEC_DIM = 128

    def __init__(self, key, use_dpt=False, layer_index=None, decoder_layer_index=None):
        self.is_dpt = use_dpt
        self.layer_index = layer_index
        self.decoder_layer_index = decoder_layer_index
        self.mean = jnp.array([0.485, 0.456, 0.406], jnp.float32)
        self.std = jnp.array([0.229, 0.224, 0.225], jnp.float32)
        k1, k2 = jax.random.split(key, 2)
        kdim = 3 * self.PATCH * self.PATCH
        # deterministic synthetic weights (stand-in for checkpoint load)
        self.w_patch = 0.02 * jax.random.normal(k1, (kdim, self.ENC_DIM), jnp.float32)
        self.b_patch = jnp.zeros((self.ENC_DIM,), jnp.float32)
        self.ln_gamma = jnp.ones((self.ENC_DIM,), jnp.float32)
        self.ln_beta = jnp.zeros((self.ENC_DIM,), jnp.float32)
        self.w_dec = 0.02 * jax.random.normal(k2, (self.ENC_DIM, self.DEC_DIM), jnp.float32)
        self.b_dec = jnp.zeros((self.DEC_DIM,), jnp.float32)
        # Fold (x - mean)/std exactly into the patch-embed linear layer (once).
        self.w_fold, self.b_fold = fold_normalization(
            self.w_patch, self.b_patch, self.mean, self.std, self.PATCH)

    def __call__(self, images, dpt_pred=None, dpt_conf=None):
        B, C, H, W = images.shape
        hp, wp = H // self.PATCH, W // self.PATCH
        assert hp == wp, "non-square patch grid not supported (torch code assumes square)"

        if not self.is_dpt:
            return _forward_layer(images, self.w_fold, self.b_fold,
                                  self.ln_gamma, self.ln_beta, patch=self.PATCH)
        return _forward_dpt(images, dpt_pred, dpt_conf,
                            self.w_patch, self.b_patch, self.ln_gamma, self.ln_beta,
                            self.w_dec, self.b_dec, patch=self.PATCH)


# ----------------------------------- main ----------------------------------- #

if __name__ == "__main__":
    key = jax.random.PRNGKey(0)
    k_img, k_dpt, k_conf, k_param = jax.random.split(key, 4)

    B, C, H, W = 2, 3, 32, 32
    images = jax.random.uniform(k_img, (B, C, H, W), jnp.float32)
    # synthetic DPT disparity prediction (1 channel) + confidence in [0, 1]
    dpt_pred = jax.random.normal(k_dpt, (B, 1, H, W), jnp.float32)
    dpt_conf = jax.nn.sigmoid(jax.random.normal(k_conf, (B, H, W), jnp.float32))

    # encoder-layer path (crocov2_..._layer=6, use_dpt=False)
    extractor_layer = CrocoFeatureExtractorPallas(k_param, use_dpt=False, layer_index=6)
    out_layer = extractor_layer(images)

    # decoder path with DPT fusion (crocov2_..._decoder=7, use_dpt=True)
    extractor_dpt = CrocoFeatureExtractorPallas(k_param, use_dpt=True, decoder_layer_index=7)
    out_dpt = extractor_dpt(images, dpt_pred=dpt_pred, dpt_conf=dpt_conf)

    jax.block_until_ready(out_layer["feature_maps"])
    jax.block_until_ready(out_dpt["feature_maps"])

    assert out_layer["feature_maps"].shape == (B, 128, 4, 4)
    assert out_layer["cls_tokens"].shape == (B, 128)
    assert out_dpt["feature_maps"].shape == (B, 128, 4, 4)
    assert out_dpt["cls_tokens"].shape == (B, 128)
    assert bool(jnp.all(jnp.isfinite(out_layer["feature_maps"])))
    assert bool(jnp.all(jnp.isfinite(out_dpt["feature_maps"])))

    print("KERNEL_OK")
</pallas_src>

<mosaic_0001>
module attributes {stable_mosaic.version = 11 : i64} {
  func.func @encode_ln_kernel(%arg0: i32, %arg1: memref<16x192xbf16, #tpu.memory_space<vmem>>, %arg2: memref<192x128xbf16, #tpu.memory_space<vmem>>, %arg3: memref<1x128xf32, #tpu.memory_space<vmem>>, %arg4: memref<1x128xf32, #tpu.memory_space<vmem>>, %arg5: memref<1x128xf32, #tpu.memory_space<vmem>>, %arg6: memref<16x128xf32, #tpu.memory_space<vmem>>) attributes {dimension_semantics = [#tpu.dimension_semantics<parallel>], iteration_bounds = array<i64: 2>, scalar_prefetch = 0 : i64, scratch_operands = 0 : i64, tpu.core_type = #tpu.core_type<tc>, window_params = [{transform_indices = @transform_0, window_bounds = array<i64: 16, 192>}, {pipeline_mode = #tpu.pipeline_mode<synchronous>, transform_indices = @transform_1, window_bounds = array<i64: 192, 128>}, {pipeline_mode = #tpu.pipeline_mode<synchronous>, transform_indices = @transform_2, window_bounds = array<i64: 1, 128>}, {pipeline_mode = #tpu.pipeline_mode<synchronous>, transform_indices = @transform_3, window_bounds = array<i64: 1, 128>}, {pipeline_mode = #tpu.pipeline_mode<synchronous>, transform_indices = @transform_4, window_bounds = array<i64: 1, 128>}, {transform_indices = @transform_5, window_bounds = array<i64: 16, 128>}]} {
    %c0 = arith.constant 0 : index
    %c0_0 = arith.constant 0 : index
    %0 = vector.load %arg1[%c0, %c0_0] : memref<16x192xbf16, #tpu.memory_space<vmem>>, vector<16x192xbf16>
    %c0_1 = arith.constant 0 : index
    %c0_2 = arith.constant 0 : index
    %1 = vector.load %arg2[%c0_1, %c0_2] : memref<192x128xbf16, #tpu.memory_space<vmem>>, vector<192x128xbf16>
    %cst = arith.constant dense<0.000000e+00> : vector<16x128xf32>
    %2 = tpu.matmul %0, %1, %cst {dimension_numbers = #tpu.dot_dimension_numbers<[1], [0], [0], [1], [0, 0, 1, 1], [], []>} : vector<16x192xbf16>, vector<192x128xbf16>, vector<16x128xf32> -> vector<16x128xf32>
    %c0_3 = arith.constant 0 : index
    %c0_4 = arith.constant 0 : index
    %3 = vector.load %arg3[%c0_3, %c0_4] : memref<1x128xf32, #tpu.memory_space<vmem>>, vector<1x128xf32>
    %4 = vector.broadcast %3 : vector<1x128xf32> to vector<16x128xf32>
    %5 = arith.addf %2, %4 : vector<16x128xf32>
    %cst_5 = arith.constant dense<0.000000e+00> : vector<16xf32>
    %6 = vector.multi_reduction <add>, %5, %cst_5 [1] : vector<16x128xf32> to vector<16xf32>
    %7 = vector.shape_cast %6 : vector<16xf32> to vector<16x1xf32>
    %cst_6 = arith.constant 1.280000e+02 : f32
    %8 = vector.broadcast %cst_6 : f32 to vector<16x1xf32>
    %9 = arith.divf %7, %8 : vector<16x1xf32>
    %10 = vector.broadcast %9 : vector<16x1xf32> to vector<16x128xf32>
    %11 = arith.subf %5, %10 : vector<16x128xf32>
    %12 = arith.mulf %11, %11 : vector<16x128xf32>
    %cst_7 = arith.constant dense<0.000000e+00> : vector<16xf32>
    %13 = vector.multi_reduction <add>, %12, %cst_7 [1] : vector<16x128xf32> to vector<16xf32>
    %14 = vector.shape_cast %13 : vector<16xf32> to vector<16x1xf32>
    %cst_8 = arith.constant 1.280000e+02 : f32
    %15 = vector.broadcast %cst_8 : f32 to vector<16x1xf32>
    %16 = arith.divf %14, %15 : vector<16x1xf32>
    %17 = vector.broadcast %9 : vector<16x1xf32> to vector<16x128xf32>
    %18 = arith.subf %5, %17 : vector<16x128xf32>
    %cst_9 = arith.constant 9.99999974E-6 : f32
    %19 = vector.broadcast %cst_9 : f32 to vector<16x1xf32>
    %20 = arith.addf %16, %19 : vector<16x1xf32>
    %21 = math.rsqrt %20 : vector<16x1xf32>
    %22 = vector.broadcast %21 : vector<16x1xf32> to vector<16x128xf32>
    %23 = arith.mulf %18, %22 : vector<16x128xf32>
    %c0_10 = arith.constant 0 : index
    %c0_11 = arith.constant 0 : index
    %24 = vector.load %arg4[%c0_10, %c0_11] : memref<1x128xf32, #tpu.memory_space<vmem>>, vector<1x128xf32>
    %25 = vector.broadcast %24 : vector<1x128xf32> to vector<16x128xf32>
    %26 = arith.mulf %23, %25 : vector<16x128xf32>
    %c0_12 = arith.constant 0 : index
    %c0_13 = arith.constant 0 : index
    %27 = vector.load %arg5[%c0_12, %c0_13] : memref<1x128xf32, #tpu.memory_space<vmem>>, vector<1x128xf32>
    %28 = vector.broadcast %27 : vector<1x128xf32> to vector<16x128xf32>
    %29 = arith.addf %26, %28 : vector<16x128xf32>
    %c0_14 = arith.constant 0 : index
    %c0_15 = arith.constant 0 : index
    %30 = vector.load %arg6[%c0_14, %c0_15] : memref<16x128xf32, #tpu.memory_space<vmem>>, vector<16x128xf32>
    tpu.vector_store %arg6[%c0_14, %c0_15], %29 {strides = array<i32>} : memref<16x128xf32, #tpu.memory_space<vmem>>, vector<16x128xf32>,
    return
  }
  func.func @transform_0(%arg0: i32) -> (i32, i32) {
    %c0_i32 = arith.constant 0 : i32
    %c0_i32_0 = arith.constant 0 : i32
    return %arg0, %c0_i32 : i32, i32
  }
  func.func @transform_1(%arg0: i32) -> (i32, i32) {
    %c0_i32 = arith.constant 0 : i32
    %c0_i32_0 = arith.constant 0 : i32
    %c0_i32_1 = arith.constant 0 : i32
    return %c0_i32, %c0_i32_0 : i32, i32
  }
  func.func @transform_2(%arg0: i32) -> (i32, i32) {
    %c0_i32 = arith.constant 0 : i32
    %c0_i32_0 = arith.constant 0 : i32
    %c0_i32_1 = arith.constant 0 : i32
    return %c0_i32, %c0_i32_0 : i32, i32
  }
  func.func @transform_3(%arg0: i32) -> (i32, i32) {
    %c0_i32 = arith.constant 0 : i32
    %c0_i32_0 = arith.constant 0 : i32
    %c0_i32_1 = arith.constant 0 : i32
    return %c0_i32, %c0_i32_0 : i32, i32
  }
  func.func @transform_4(%arg0: i32) -> (i32, i32) {
    %c0_i32 = arith.constant 0 : i32
    %c0_i32_0 = arith.constant 0 : i32
    %c0_i32_1 = arith.constant 0 : i32
    return %c0_i32, %c0_i32_0 : i32, i32
  }
  func.func @transform_5(%arg0: i32) -> (i32, i32) {
    %c0_i32 = arith.constant 0 : i32
    %c0_i32_0 = arith.constant 0 : i32
    return %arg0, %c0_i32 : i32, i32
  }
}

</mosaic_0001>

<llo_original>
// kernel: _forward_layer.1
$region0: #{_forward_layer.1}
  #allocation0 [shape = 'u32[]', space=smem, size = 0x4, offset = 0x4, fixed_abs, tag = 'smem constant byte address 0x4 - core index']
  #allocation1 [shape = 'u32[144,128]{1,0:T(1,128)}', space=vmem, size = 0x12000, scoped, tag = 'internal scratch']
  %s0 = inlined_call_operand.vmem [shape: bf16[32,192], index: 0, kind: input, shape index: {}]
  %s1 = inlined_call_operand.vmem [shape: bf16[192,128], index: 1, kind: input, shape index: {}]
  %s2 = inlined_call_operand.vmem [shape: f32[1,128], index: 2, kind: input, shape index: {}]
  %s3 = inlined_call_operand.vmem [shape: f32[1,128], index: 3, kind: input, shape index: {}]
  %s4 = inlined_call_operand.vmem [shape: f32[1,128], index: 4, kind: input, shape index: {}]
  %s5 = inlined_call_operand.hbm [shape: f32[32,128], index: 5, kind: output, shape index: {}]
  %s6 = sld [smem:[#allocation0]]
  $region53: #{_forward_layer.1} parent=0
    _
  %s8 = ssub.s32 1, %s6
  %s9 = scalar_select 0, %s8, %s6
  $region1: #{_forward_layer.1} parent=0
    #allocation2 [shape = 'u8[16384]{0}', space=vmem, size = 0x4000, scoped, tag = 'output window, operand 0']
    #allocation3 [shape = 's32[2]{0}', space=sflag, size = 0x8, scoped, tag = 'scoped memory for _forward_layer.1']
    %10 = vsyncpa [#allocation3], 0
    %s11 = scalar_lea.sflag [#allocation3], 1
    %12 = vsyncpa %s11, 0
    loop: start=0, step=1, limit=4
    $region2: #{_forward_layer.1} parent=1 // loop_pre_header
      _
    $region3: #{_forward_layer.1} parent=1 // loop_header
      %s14 = sphi 0, %s18
      %p15 = scmp.ge.s32.totalorder %s14, 4
      %s24 = sphi 0, %s26
      %s27 = sphi 0, %s24
      %s28 = sphi 0, %s27
      %s44 = sphi 0, %s28
      %s48 = sphi 0, %s48
      %s50 = sphi 0, %s48
      %s51 = sphi 0, %s50
      %s65 = sphi 0, %s51
      %s69 = sphi 0, %s69
      %s71 = sphi 0, %s69
      %s72 = sphi 0, %s71
      %s86 = sphi 0, %s72
      %s90 = sphi 0, %s90
      %s92 = sphi 0, %s90
      %s93 = sphi 0, %s92
      %s107 = sphi 0, %s93
      %s111 = sphi 0, %s111
      %s113 = sphi 0, %s111
      %s114 = sphi 0, %s113
      %s128 = sphi 0, %s114
      %s134 = sphi 0, %s136
      %s137 = sphi 0, %s134
      %s138 = sphi 0, %s137
      %s154 = sphi 0, %s138
    $region4: #{_forward_layer.1} parent=1 // loop_header_branch
      %17 = sbr.rel (%p15) target = $region8
    $region5: #{_forward_layer.1} parent=1 // loop_body
      %s19 = ssub.s32 %s14, 1
      %s20 = ssub.s32 %s14, 2
      %s21 = sadd.s32 %s14, 1
      %s22 = ssub.s32 %s14, %s21
      %p23 = scmp.eq.s32.totalorder %s22, 0
      %s25 = sadd.s32 %s24, 1
      %s26 = scalar_select %p23, %s24, %s25
      %p29 = pneg %p23
      %p30 = scmp.eq.s32.totalorder %s14, 1
      %p31 = por %p29, %p30
      %p32 = scmp.ne.s32.totalorder %s24, %s27
      %p33 = scmp.eq.s32.totalorder %s14, 0
      %p34 = por %p32, %p33
      %p35 = scmp.ne.s32.totalorder %s24, %s27
      %p36 = scmp.eq.s32.totalorder %s19, 1
      %p37 = por %p35, %p36
      %p38 = scmp.ne.s32.totalorder %s27, %s28
      %p39 = scmp.eq.s32.totalorder %s19, 0
      %p40 = por %p38, %p39
      %p41 = scmp.ne.s32.totalorder %s27, %s28
      %p42 = scmp.eq.s32.totalorder %s20, 1
      %p43 = por %p41, %p42
      %p45 = scmp.ne.s32.totalorder %s28, %s44
      %p46 = scmp.eq.s32.totalorder %s20, 0
      %p47 = por %p45, %p46
      %s49 = sadd.s32 %s48, 1
      %p52 = scmp.eq.s32.totalorder %s14, 1
      %p53 = scmp.ne.s32.totalorder %s48, %s50
      %p54 = scmp.eq.s32.totalorder %s14, 0
      %p55 = por %p53, %p54
      %p56 = scmp.ne.s32.totalorder %s48, %s50
      %p57 = scmp.eq.s32.totalorder %s19, 1
      %p58 = por %p56, %p57
      %p59 = scmp.ne.s32.totalorder %s50, %s51
      %p60 = scmp.eq.s32.totalorder %s19, 0
      %p61 = por %p59, %p60
      %p62 = scmp.ne.s32.totalorder %s50, %s51
      %p63 = scmp.eq.s32.totalorder %s20, 1
      %p64 = por %p62, %p63
      %p66 = scmp.ne.s32.totalorder %s51, %s65
      %p67 = scmp.eq.s32.totalorder %s20, 0
      %p68 = por %p66, %p67
      %s70 = sadd.s32 %s69, 1
      %p73 = scmp.eq.s32.totalorder %s14, 1
      %p74 = scmp.ne.s32.totalorder %s69, %s71
      %p75 = scmp.eq.s32.totalorder %s14, 0
      %p76 = por %p74, %p75
      %p77 = scmp.ne.s32.totalorder %s69, %s71
      %p78 = scmp.eq.s32.totalorder %s19, 1
      %p79 = por %p77, %p78
      %p80 = scmp.ne.s32.totalorder %s71, %s72
      %p81 = scmp.eq.s32.totalorder %s19, 0
      %p82 = por %p80, %p81
      %p83 = scmp.ne.s32.totalorder %s71, %s72
      %p84 = scmp.eq.s32.totalorder %s20, 1
      %p85 = por %p83, %p84
      %p87 = scmp.ne.s32.totalorder %s72, %s86
      %p88 = scmp.eq.s32.totalorder %s20, 0
      %p89 = por %p87, %p88
      %s91 = sadd.s32 %s90, 1
      %p94 = scmp.eq.s32.totalorder %s14, 1
      %p95 = scmp.ne.s32.totalorder %s90, %s92
      %p96 = scmp.eq.s32.totalorder %s14, 0
      %p97 = por %p95, %p96
      %p98 = scmp.ne.s32.totalorder %s90, %s92
      %p99 = scmp.eq.s32.totalorder %s19, 1
      %p100 = por %p98, %p99
      %p101 = scmp.ne.s32.totalorder %s92, %s93
      %p102 = scmp.eq.s32.totalorder %s19, 0
      %p103 = por %p101, %p102
      %p104 = scmp.ne.s32.totalorder %s92, %s93
      %p105 = scmp.eq.s32.totalorder %s20, 1
      %p106 = por %p104, %p105
      %p108 = scmp.ne.s32.totalorder %s93, %s107
      %p109 = scmp.eq.s32.totalorder %s20, 0
      %p110 = por %p108, %p109
      %s112 = sadd.s32 %s111, 1
      %p115 = scmp.eq.s32.totalorder %s14, 1
      %p116 = scmp.ne.s32.totalorder %s111, %s113
      %p117 = scmp.eq.s32.totalorder %s14, 0
      %p118 = por %p116, %p117
      %p119 = scmp.ne.s32.totalorder %s111, %s113
      %p120 = scmp.eq.s32.totalorder %s19, 1
      %p121 = por %p119, %p120
      %p122 = scmp.ne.s32.totalorder %s113, %s114
      %p123 = scmp.eq.s32.totalorder %s19, 0
      %p124 = por %p122, %p123
      %p125 = scmp.ne.s32.totalorder %s113, %s114
      %p126 = scmp.eq.s32.totalorder %s20, 1
      %p127 = por %p125, %p126
      %p129 = scmp.ne.s32.totalorder %s114, %s128
      %p130 = scmp.eq.s32.totalorder %s20, 0
      %p131 = por %p129, %p130
      %s132 = ssub.s32 %s14, %s21
      %p133 = scmp.eq.s32.totalorder %s132, 0
      %s135 = sadd.s32 %s134, 1
      %s136 = scalar_select %p133, %s134, %s135
      %p139 = pneg %p133
      %p140 = scmp.eq.s32.totalorder %s14, 1
      %p141 = por %p139, %p140
      %p142 = scmp.ne.s32.totalorder %s134, %s137
      %p143 = scmp.eq.s32.totalorder %s14, 0
      %p144 = por %p142, %p143
      %p145 = scmp.ne.s32.totalorder %s134, %s137
      %p146 = scmp.eq.s32.totalorder %s19, 1
      %p147 = por %p145, %p146
      %p148 = scmp.ne.s32.totalorder %s137, %s138
      %p149 = scmp.eq.s32.totalorder %s19, 0
      %p150 = por %p148, %p149
      %p151 = scmp.ne.s32.totalorder %s137, %s138
      %p152 = scmp.eq.s32.totalorder %s20, 1
      %p153 = por %p151, %p152
      %p155 = scmp.ne.s32.totalorder %s138, %s154
      %p156 = scmp.eq.s32.totalorder %s20, 0
      %p157 = por %p155, %p156
      %p158 = scmp.le.s32.totalorder 1, %s14
      %p159 = scmp.lt.s32.totalorder %s14, 3
      %p160 = pnand %p158, %p159
      %p161 = pneg %p160
      // Predicated region
      $region9: #{_forward_layer.1} parent=5 // pred_check
        _
      $region10: #{_forward_layer.1} parent=5 // pred_check_branch
        %163 = sbr.rel (%p160) target = $region12
      $region11: #{_forward_layer.1} parent=5 // pred_region
        %s164 = ssub.s32 %s14, 1
        // Predicated region
        $region13: #{_forward_layer.1} parent=11 // pred_check
          %p165 = pneg %p61
        $region14: #{_forward_layer.1} parent=11 // pred_check_branch
          %167 = sbr.rel (%p165) target = $region16
        $region15: #{_forward_layer.1} parent=11 // pred_region
          _
        $region16: #{_forward_layer.1} parent=11 // pred_fallthru
          _
        // Predicated region
        $region17: #{_forward_layer.1} parent=11 // pred_check
          %p168 = pneg %p82
        $region18: #{_forward_layer.1} parent=11 // pred_check_branch
          %170 = sbr.rel (%p168) target = $region20
        $region19: #{_forward_layer.1} parent=11 // pred_region
          _
        $region20: #{_forward_layer.1} parent=11 // pred_fallthru
          _
        // Predicated region
        $region21: #{_forward_layer.1} parent=11 // pred_check
          %p171 = pneg %p103
        $region22: #{_forward_layer.1} parent=11 // pred_check_branch
          %173 = sbr.rel (%p171) target = $region24
        $region23: #{_forward_layer.1} parent=11 // pred_region
          _
        $region24: #{_forward_layer.1} parent=11 // pred_fallthru
          _
        // Predicated region
        $region25: #{_forward_layer.1} parent=11 // pred_check
          %p174 = pneg %p124
        $region26: #{_forward_layer.1} parent=11 // pred_check_branch
          %176 = sbr.rel (%p174) target = $region28
        $region27: #{_forward_layer.1} parent=11 // pred_region
          _
        $region28: #{_forward_layer.1} parent=11 // pred_fallthru
          _
      $region12: #{_forward_layer.1} parent=5 // pred_fallthru
        _
      %p177 = scmp.lt.s32.totalorder %s14, 2
      // Predicated region
      $region29: #{_forward_layer.1} parent=5 // pred_check
        %p178 = pneg %p177
      $region30: #{_forward_layer.1} parent=5 // pred_check_branch
        %180 = sbr.rel (%p178) target = $region32
      $region31: #{_forward_layer.1} parent=5 // pred_region
        // Predicated region
        $region33: #{_forward_layer.1} parent=31 // pred_check
          %p181 = pneg %p34
        $region34: #{_forward_layer.1} parent=31 // pred_check_branch
          %183 = sbr.rel (%p181) target = $region36
        $region35: #{_forward_layer.1} parent=31 // pred_region
          %s184 = smul.u32 2, %s14
          %p185 = scmp.lt.s32.totalorder %s184, 3
          %s186 = scalar_select %p185, %s184, 3
          %s187 = smul.addr %s186, 2
          %s188 = smul.addr %s187, 4
          %s189 = scalar_lea.vmem %s0, %s188
          %s190 = smul.u32 2, %s14
        $region36: #{_forward_layer.1} parent=31 // pred_fallthru
          _
      $region32: #{_forward_layer.1} parent=5 // pred_fallthru
        _
      %p191 = scmp.le.s32.totalorder 1, %s14
      %p192 = scmp.lt.s32.totalorder %s14, 3
      %p193 = pnand %p191, %p192
      %p194 = pneg %p193
      // Predicated region
      $region37: #{_forward_layer.1} parent=5 // pred_check
        _
      $region38: #{_forward_layer.1} parent=5 // pred_check_branch
        %196 = sbr.rel (%p193) target = $region40
      $region39: #{_forward_layer.1} parent=5 // pred_region
        %s197 = ssub.s32 %s14, 1
        %s198 = smul.u32 2, %s19
        %p199 = scmp.lt.s32.totalorder %s198, 3
        %s200 = scalar_select %p199, %s198, 3
        %s201 = smul.addr %s200, 2
        %s202 = smul.addr %s201, 4
        %s203 = scalar_lea.vmem %s0, %s202
        %p204 = pneg %p40
        %p205 = pneg %p37
        %p206 = pneg %p61
        %p207 = pneg %p58
        %p208 = pneg %p82
        %p209 = pneg %p79
        %p210 = pneg %p103
        %p211 = pneg %p100
        %p212 = pneg %p124
        %p213 = pneg %p121
        %p214 = pneg %p150
        %p215 = pneg %p147
        %s216 = sand.u32 %s137, 1
        %s217 = scalar_lea.sflag [#allocation3], %s216
        %s218 = sand.u32 %s137, 1
        %s219 = smul.addr %s218, 16
        %s220 = scalar_lea.vmem [#allocation2], %s219
        %s221 = smul.u32 2, %s19
        %p222 = scmp.lt.s32.totalorder %s221, 3
        %s223 = scalar_select %p222, %s221, 3
        %s224 = smul.addr %s223, 2
        %s225 = smul.addr %s224, 4
        %s226 = scalar_lea.vmem %s0, %s225
        %s227 = smul.u32 2, %s19
        %s228 = smul.u32 2, %s19
        %v230 = vld [vmem:[%s226] sm:$0xff]
        %v231 = vld [vmem:[%s226 + $0x8] sm:$0xff]
        %v232 = vld [vmem:[%s1] sm:$0xf]
        %v233 = vld [vmem:[%s1 + $0x4] sm:$0xf]
        %v234 = vld [vmem:[%s1 + $0x8] sm:$0xf]
        %v235 = vld [vmem:[%s1 + $0xc] sm:$0xf]
        %v236 = vld [vmem:[%s1 + $0x10] sm:$0xf]
        %v237 = vld [vmem:[%s1 + $0x14] sm:$0xf]
        %v238 = vld [vmem:[%s1 + $0x18] sm:$0xf]
        %v239 = vld [vmem:[%s1 + $0x1c] sm:$0xf]
        %v240 = vld [vmem:[%s1 + $0x20] sm:$0xf]
        %v241 = vld [vmem:[%s1 + $0x24] sm:$0xf]
        %v242 = vld [vmem:[%s1 + $0x28] sm:$0xf]
        %v243 = vld [vmem:[%s1 + $0x2c] sm:$0xf]
        %v244 = vld [vmem:[%s1 + $0x30] sm:$0xf]
        %v245 = vld [vmem:[%s1 + $0x34] sm:$0xf]
        %v246 = vld [vmem:[%s1 + $0x38] sm:$0xf]
        %v247 = vld [vmem:[%s1 + $0x3c] sm:$0xf]
        %v248 = vld [vmem:[%s1 + $0x40] sm:$0xf]
        %v249 = vld [vmem:[%s1 + $0x44] sm:$0xf]
        %v250 = vld [vmem:[%s1 + $0x48] sm:$0xf]
        %v251 = vld [vmem:[%s1 + $0x4c] sm:$0xf]
        %v252 = vld [vmem:[%s1 + $0x50] sm:$0xf]
        %v253 = vld [vmem:[%s1 + $0x54] sm:$0xf]
        %v254 = vld [vmem:[%s1 + $0x58] sm:$0xf]
        %v255 = vld [vmem:[%s1 + $0x5c] sm:$0xf]
        %v256 = vld [vmem:[%s2] sm:$0x1]
        %v258 = vlaneseq
        %v259 = vshrl.u32 %v258, 7
        %v260 = vsub.s32 0, %v259
        %v261 = vrot.slane %v256, %v260
        %v265 = vunpack.c.l.b16 %v230
        %v266 = vunpack.c.h.b16 %v230
        %v267 = vunpack.c.l.b16 %v231
        %v268 = vunpack.c.h.b16 %v231
        %v269 = vpack.c.b16 %v267, %v265
        %v270 = vpack.c.b16 %v268, %v266
        %v296 = vunpack.c.l.b16 %v232
        %v297 = vunpack.c.l.b16 %v233
        %v298 = vunpack.c.l.b16 %v234
        %v299 = vunpack.c.l.b16 %v235
        %v300 = vunpack.c.l.b16 %v236
        %v301 = vunpack.c.l.b16 %v237
        %v302 = vunpack.c.l.b16 %v238
        %v303 = vunpack.c.l.b16 %v239
        %v304 = vunpack.c.l.b16 %v240
        %v305 = vunpack.c.l.b16 %v241
        %v306 = vunpack.c.l.b16 %v242
        %v307 = vunpack.c.l.b16 %v243
        %v308 = vunpack.c.l.b16 %v244
        %v309 = vunpack.c.l.b16 %v245
        %v310 = vunpack.c.l.b16 %v246
        %v311 = vunpack.c.l.b16 %v247
        %v312 = vunpack.c.l.b16 %v248
        %v313 = vunpack.c.l.b16 %v249
        %v314 = vunpack.c.l.b16 %v250
        %v315 = vunpack.c.l.b16 %v251
        %v316 = vunpack.c.l.b16 %v252
        %v317 = vunpack.c.l.b16 %v253
        %v318 = vunpack.c.l.b16 %v254
        %v319 = vunpack.c.l.b16 %v255
        %v320 = vpack.c.b16 %v297, %v296
        %v321 = vpack.c.b16 %v299, %v298
        %v322 = vpack.c.b16 %v301, %v300
        %v323 = vpack.c.b16 %v303, %v302
        %v324 = vpack.c.b16 %v305, %v304
        %v325 = vpack.c.b16 %v307, %v306
        %v326 = vpack.c.b16 %v309, %v308
        %v327 = vpack.c.b16 %v311, %v310
        %v328 = vpack.c.b16 %v313, %v312
        %v329 = vpack.c.b16 %v315, %v314
        %v330 = vpack.c.b16 %v317, %v316
        %v331 = vpack.c.b16 %v319, %v318
        %vm344 = vcmask 523264
        %v346 = vsel %vm344, %v270, 0
        %348 = vmatprep.subr.bf16.mxu0 0
        %349 = vmatpush1.bf16.msra.mxu0 %v320
        %350 = vmatprep.subr.bf16.mxu0 0
        %351 = vmatpush1.bf16.msra.mxu0 %v321
        %352 = vmatprep.subr.bf16.mxu0 0
        %353 = vmatpush1.bf16.msra.mxu0 %v322
        %354 = vmatprep.subr.bf16.mxu0 0
        %355 = vmatpush1.bf16.msra.mxu0 %v323
        %356 = vmatprep.subr.bf16.mxu0 0
        %357 = vmatpush1.bf16.msra.mxu0 %v324
        %358 = vmatprep.subr.bf16.mxu0 0
        %359 = vmatpush1.bf16.msra.mxu0 %v325
        %360 = vmatprep.subr.bf16.mxu0 0
        %361 = vmatpush1.bf16.msra.mxu0 %v326
        %362 = vmatprep.subr.bf16.mxu0 0
        %363 = vmatpush1.bf16.msra.mxu0 %v327
        %364 = vmatprep.subr.bf16.mxu0 0
        %365 = vmatpush1.bf16.msra.mxu0 %v328
        %366 = vmatprep.subr.bf16.mxu0 0
        %367 = vmatpush1.bf16.msra.mxu0 %v329
        %368 = vmatprep.subr.bf16.mxu0 0
        %369 = vmatpush1.bf16.msra.mxu0 %v330
        %370 = vmatprep.subr.bf16.mxu0 0
        %371 = vmatpush1.bf16.msra.mxu0 %v331
        %372 = vmatprep.subr.bf16.mxu0 0
        %373 = vmatpush1.bf16.msra.mxu0 0
        %374 = vmatprep.subr.bf16.mxu0 0
        %375 = vmatpush1.bf16.msra.mxu0 0
        %376 = vmatprep.subr.bf16.mxu0 0
        %377 = vmatpush1.bf16.msra.mxu0 0
        %378 = vmatprep.subr.bf16.mxu0 0
        %379 = vmatpush1.bf16.msra.mxu0 0
        %380 = vmatprep.mubr.bf16.mxu0 %v346
        %381 = vmatmul.mubr.bf16.gmra.mrb[0].mxu0 %v269
        %v382 = vpop.f32.mrb[0].mxu0
        %v383 = vadd.f32 %v261, %v382
        %v384 = vpop.f32.mrb[0].mxu0
        %v385 = vpop.f32.mrb[0].mxu0
        %v386 = vadd.f32 %v261, %v385
        %v387 = vpop.f32.mrb[0].mxu0
        %388 = vdwg.mxu0
        %389 = vadd.xlane.f32.xlu0 %v383
        %v390 = vpop.xlane.xlu0 %389
        %391 = vadd.xlane.f32.xlu0 %v386
        %v392 = vpop.xlane.xlu0 %391
        %v393 = vrcp.pop 128.0
        %v394 = vmul.f32 %v390, %v393
        %v395 = vmul.f32 %v392, %v393
        %v396 = vsub.f32 %v383, %v394
        %v397 = vsub.f32 %v386, %v395
        %v398 = vmul.f32 %v396, %v396
        %v399 = vmul.f32 %v397, %v397
        %400 = vadd.xlane.f32.xlu0 %v398
        %v401 = vpop.xlane.xlu0 %400
        %402 = vadd.xlane.f32.xlu0 %v399
        %v403 = vpop.xlane.xlu0 %402
        %v404 = vmul.f32 %v401, %v393
        %v405 = vmul.f32 %v403, %v393
        %v406 = vadd.f32 %v404, 1e-05
        %v407 = vadd.f32 %v405, 1e-05
        %v408 = vrsqrt.pop %v406
        %v409 = vrsqrt.pop %v407
        %v410 = vmul.f32 %v396, %v408
        %v411 = vmul.f32 %v397, %v409
        %v412 = vld [vmem:[%s3] sm:$0x1]
        %v414 = vlaneseq
        %v415 = vshrl.u32 %v414, 7
        %v416 = vsub.s32 0, %v415
        %v417 = vrot.slane %v412, %v416
        %v419 = vmul.f32 %v410, %v417
        %v420 = vmul.f32 %v411, %v417
        %v421 = vld [vmem:[%s4] sm:$0x1]
        %v423 = vlaneseq
        %v424 = vshrl.u32 %v423, 7
        %v425 = vsub.s32 0, %v424
        %v426 = vrot.slane %v421, %v425
        %v428 = vadd.f32 %v419, %v426
        %v429 = vadd.f32 %v420, %v426
        %430 = vst [vmem:[%s220] sm:$0xff] %v428
        %431 = vst [vmem:[%s220 + $0x8] sm:$0xff] %v429
        %s432 = sand.u32 %s137, 1
        %s433 = scalar_lea.sflag [#allocation3], %s432
        %s434 = sand.u32 %s137, 1
        %s435 = smul.addr %s434, 16
        %s436 = scalar_lea.vmem [#allocation2], %s435
        // Predicated region
        $region41: #{_forward_layer.1} parent=39 // pred_check
          %p437 = pneg %p147
        $region42: #{_forward_layer.1} parent=39 // pred_check_branch
          %439 = sbr.rel (%p437) target = $region44
        $region43: #{_forward_layer.1} parent=39 // pred_region
          %s440 = smul.u32 2, %s19
          %s442 = ssub.s32 256, 256
          %443 = vsyncadd %s433, %s442
          %s444 = smul.addr %s440, 128
          %s445 = scalar_lea.hbm %s5, %s444
          %s446 = sshll.u32 %s436, 4
          %s447 = int_to_ptr.vmem [resolvable:$true] %s446
          %452 = dma.vmem_to_hbm [thread:$0]  %s447, 256, %s445, %s433, 128, 128, 8
        $region44: #{_forward_layer.1} parent=39 // pred_fallthru
          _
      $region40: #{_forward_layer.1} parent=5 // pred_fallthru
        _
      %p453 = scmp.le.s32.totalorder 2, %s14
      // Predicated region
      $region45: #{_forward_layer.1} parent=5 // pred_check
        %p454 = pneg %p453
      $region46: #{_forward_layer.1} parent=5 // pred_check_branch
        %456 = sbr.rel (%p454) target = $region48
      $region47: #{_forward_layer.1} parent=5 // pred_region
        %s457 = ssub.s32 %s14, 2
        // Predicated region
        $region49: #{_forward_layer.1} parent=47 // pred_check
          %p458 = pneg %p153
        $region50: #{_forward_layer.1} parent=47 // pred_check_branch
          %460 = sbr.rel (%p458) target = $region52
        $region51: #{_forward_layer.1} parent=47 // pred_region
          %s461 = sand.u32 %s138, 1
          %s462 = scalar_lea.sflag [#allocation3], %s461
          %s463 = sand.u32 %s138, 1
          %s464 = smul.addr %s463, 16
          %s465 = scalar_lea.vmem [#allocation2], %s464
          %466 = dma.done %s462, 256
        $region52: #{_forward_layer.1} parent=47 // pred_fallthru
          _
      $region48: #{_forward_layer.1} parent=5 // pred_fallthru
        _
    $region6: #{_forward_layer.1} parent=1 // loop_footer
      %s18 = sadd.s32 1, %s14
    $region7: #{_forward_layer.1} parent=1 // loop_footer_branch
      %13 = sbr.rel target = $region3
    $region8: #{_forward_layer.1} parent=1 // loop_exit
      _
    %467 = vsyncpa [#allocation3], 1
    %s468 = scalar_lea.sflag [#allocation3], 1
    %469 = vsyncpa %s468, 1

</llo_original>
